<compile_context>
chip_gen: v7x
topology: tpu7x:2x2x1
jax: 0.10.0
libtpu: 0.0.40
codegen_flags: <defaults>
</compile_context>

<pallas_src>
import math

import jax
import jax.numpy as jnp
from jax.experimental import pallas as pl
from jax.experimental.pallas import tpu as pltpu

_LANE = 128
_TILE_BYTES = 4 * 1024 * 1024            # per-buffer tile budget (safe on all gens)
_PER_SAMPLE_PATH_BYTES = 1 * 1024 * 1024  # min per-sample bytes to use the per-sample path


def _packing(dtype) -> int:
    """Sublane granule for this dtype: 8 (32-bit), 16 (16-bit), 32 (8-bit)."""
    bits = jnp.dtype(dtype).itemsize * 8
    return 8 * max(1, 32 // bits)


# ---------------------------------------------------------------------------
# Path A: large, lane-aligned features -> per-sample tiles + pl.when gating.
# ---------------------------------------------------------------------------
def _per_sample_kernel(mask_ref, x_ref, o_ref):
    # mask_ref: (B,) int32 in SMEM (scalar prefetch); 1 = keep, 0 = drop.
    # x_ref / o_ref: (1, Rt, C) VMEM tiles for the current (sample, row-tile).
    keep = mask_ref[pl.program_id(0)] != 0

    @pl.when(keep)
    def _():
        o_ref[...] = x_ref[...]

    @pl.when(jnp.logical_not(keep))
    def _():
        o_ref[...] = jnp.zeros_like(o_ref)


def _choose_per_sample_tiling(feat: int, itemsize: int, pack: int):
    """cols = multiple-of-128 divisor of feat (no padding); rows*cols == feat."""
    m = feat // _LANE
    sub = 1
    for d in range(8, 0, -1):
        if m % d == 0:
            sub = d
            break
    cols = _LANE * sub
    rows = m // sub
    max_rt = max(1, _TILE_BYTES // (cols * itemsize))
    if rows <= max_rt:
        row_tile = rows                               # full extent: always legal
    else:
        row_tile = max(pack, (max_rt // pack) * pack)  # packed-sublane aligned
    return rows, cols, row_tile


def _per_sample_path(x3, mask_i32, rows, cols, row_tile):
    B = x3.shape[0]
    grid = (B, pl.cdiv(rows, row_tile))
    return pl.pallas_call(
        _per_sample_kernel,
        out_shape=jax.ShapeDtypeStruct((B, rows, cols), x3.dtype),
        grid_spec=pltpu.PrefetchScalarGridSpec(
            num_scalar_prefetch=1,
            grid=grid,
            in_specs=[
                # Dropped samples pin the input block index to (0, 0, 0) so
                # Pallas elides the input DMA when the index repeats between
                # consecutive grid steps (the kernel never reads x_ref on the
                # drop path anyway).
                pl.BlockSpec((1, row_tile, cols),
                             lambda b, t, m: (b * m[b], t * m[b], 0)),
            ],
            out_specs=pl.BlockSpec((1, row_tile, cols),
                                   lambda b, t, m: (b, t, 0)),
        ),
        compiler_params=pltpu.CompilerParams(
            dimension_semantics=("parallel", "parallel")),
    )(mask_i32, x3)


# ---------------------------------------------------------------------------
# Path B: small / lane-unaligned features -> batch samples into sublanes.
# ---------------------------------------------------------------------------
def _batched_kernel(mask_ref, x_ref, o_ref):
    # mask_ref: (Bt, 1) of exact 0/1 in x.dtype; broadcasts along the lane dim.
    o_ref[...] = x_ref[...] * mask_ref[...]


def _choose_batched_tiling(B: int, feat: int, itemsize: int, pack: int):
    bt = B if B <= pack else pack
    max_ct = max(1, _TILE_BYTES // (bt * itemsize))
    if feat <= max_ct:
        ct = feat                                     # full extent: always legal
        bt_budget = max(1, _TILE_BYTES // (ct * itemsize))
        if B <= bt_budget:
            bt = B                                    # full extent: always legal
        else:
            bt = max(pack, (bt_budget // pack) * pack)
    else:
        ct = max(_LANE, (max_ct // _LANE) * _LANE)    # lane-aligned column tile
    return bt, ct


def _batched_path(x2, mask_col, bt, ct):
    B, feat = x2.shape
    grid = (pl.cdiv(B, bt), pl.cdiv(feat, ct))
    return pl.pallas_call(
        _batched_kernel,
        out_shape=jax.ShapeDtypeStruct((B, feat), x2.dtype),
        grid=grid,
        in_specs=[
            pl.BlockSpec((bt, 1), lambda i, j: (i, 0)),
            pl.BlockSpec((bt, ct), lambda i, j: (i, j)),
        ],
        out_specs=pl.BlockSpec((bt, ct), lambda i, j: (i, j)),
        compiler_params=pltpu.CompilerParams(
            dimension_semantics=("parallel", "parallel")),
    )(mask_col, x2)


# ---------------------------------------------------------------------------
# Wrapper
# ---------------------------------------------------------------------------
def stochastic_depth(x: jax.Array, drop_prob: float, key: jax.Array,
                     training: bool = True) -> jax.Array:
    """Pallas implementation of StochasticDepth.forward for (B, ...) inputs."""
    if not training:
        return x

    orig_shape = x.shape
    B = orig_shape[0]
    feat = math.prod(orig_shape[1:])
    keep_prob = 1.0 - float(drop_prob)

    # Per-sample keep mask in float32 (avoids low-precision rounding bias
    # across the keep/drop threshold); values are exactly 0.0 / 1.0.
    u = jax.random.uniform(key, (B,), dtype=jnp.float32)
    mask_f32 = jnp.floor(keep_prob + u)                      # (B,) in {0., 1.}

    itemsize = jnp.dtype(x.dtype).itemsize
    pack = _packing(x.dtype)

    if feat % _LANE == 0 and feat * itemsize >= _PER_SAMPLE_PATH_BYTES:
        rows, cols, row_tile = _choose_per_sample_tiling(feat, itemsize, pack)
        x3 = x.reshape(B, rows, cols)                        # exact: rows*cols == feat
        out3 = _per_sample_path(x3, mask_f32.astype(jnp.int32),
                                rows, cols, row_tile)
        return out3.reshape(orig_shape)

    bt, ct = _choose_batched_tiling(B, feat, itemsize, pack)
    x2 = x.reshape(B, feat)
    mask_col = mask_f32[:, None].astype(x.dtype)             # (B, 1) of {0, 1}
    out2 = _batched_path(x2, mask_col, bt, ct)
    return out2.reshape(orig_shape)


if __name__ == "__main__":
    root = jax.random.PRNGKey(0)
    kx1, km1, kx2, km2 = jax.random.split(root, 4)

    def reference(x, drop_prob, key):
        u = jax.random.uniform(key, (x.shape[0],), dtype=jnp.float32)
        m = jnp.floor((1.0 - drop_prob) + u).astype(x.dtype)
        return x * m.reshape((x.shape[0],) + (1,) * (x.ndim - 1))

    drop_prob = 0.5

    # Small-feature batched path (matches the module's typical (B, N, D) use).
    B, N, D = 2, 8, 32
    x_small = jax.random.normal(kx1, (B, N, D), dtype=jnp.float32)
    out_small = jax.block_until_ready(stochastic_depth(x_small, drop_prob, km1))
    assert out_small.shape == x_small.shape and out_small.dtype == x_small.dtype
    assert jnp.allclose(out_small, reference(x_small, drop_prob, km1)), \
        "batched path mismatch vs reference"

    # Large lane-aligned feature -> per-sample path with DMA-eliding index_map.
    x_large = jax.random.normal(kx2, (2, 512, 512), dtype=jnp.float32)  # 1 MiB/sample
    out_large = jax.block_until_ready(stochastic_depth(x_large, drop_prob, km2))
    assert jnp.allclose(out_large, reference(x_large, drop_prob, km2)), \
        "per-sample path mismatch vs reference"

    # Eval mode: identity.
    out_eval = jax.block_until_ready(
        stochastic_depth(x_small, drop_prob, km1, training=False))
    assert jnp.allclose(out_eval, x_small)

    print("KERNEL_OK")
</pallas_src>

<mosaic_0001>
module attributes {stable_mosaic.version = 11 : i64} {
  func.func @_batched_kernel(%arg0: i32, %arg1: i32, %arg2: memref<2x1xf32, #tpu.memory_space<vmem>>, %arg3: memref<2x256xf32, #tpu.memory_space<vmem>>, %arg4: memref<2x256xf32, #tpu.memory_space<vmem>>) attributes {dimension_semantics = [#tpu.dimension_semantics<parallel>, #tpu.dimension_semantics<parallel>], iteration_bounds = array<i64: 1, 1>, scalar_prefetch = 0 : i64, scratch_operands = 0 : i64, tpu.core_type = #tpu.core_type<tc>, window_params = [{transform_indices = @transform_0, window_bounds = array<i64: 2, 1>}, {transform_indices = @transform_1, window_bounds = array<i64: 2, 256>}, {transform_indices = @transform_2, window_bounds = array<i64: 2, 256>}]} {
    %c0 = arith.constant 0 : index
    %c0_0 = arith.constant 0 : index
    %0 = vector.load %arg3[%c0, %c0_0] : memref<2x256xf32, #tpu.memory_space<vmem>>, vector<2x256xf32>
    %c0_1 = arith.constant 0 : index
    %c0_2 = arith.constant 0 : index
    %1 = vector.load %arg2[%c0_1, %c0_2] : memref<2x1xf32, #tpu.memory_space<vmem>>, vector<2x1xf32>
    %2 = vector.broadcast %1 : vector<2x1xf32> to vector<2x256xf32>
    %3 = arith.mulf %0, %2 : vector<2x256xf32>
    %c0_3 = arith.constant 0 : index
    %c0_4 = arith.constant 0 : index
    %4 = vector.load %arg4[%c0_3, %c0_4] : memref<2x256xf32, #tpu.memory_space<vmem>>, vector<2x256xf32>
    tpu.vector_store %arg4[%c0_3, %c0_4], %3 {strides = array<i32>} : memref<2x256xf32, #tpu.memory_space<vmem>>, vector<2x256xf32>,
    return
  }
  func.func @transform_0(%arg0: i32, %arg1: i32) -> (i32, i32) {
    %c0_i32 = arith.constant 0 : i32
    %c0_i32_0 = arith.constant 0 : i32
    return %arg0, %c0_i32 : i32, i32
  }
  func.func @transform_1(%arg0: i32, %arg1: i32) -> (i32, i32) {
    %c0_i32 = arith.constant 0 : i32
    return %arg0, %arg1 : i32, i32
  }
  func.func @transform_2(%arg0: i32, %arg1: i32) -> (i32, i32) {
    %c0_i32 = arith.constant 0 : i32
    return %arg0, %arg1 : i32, i32
  }
}

</mosaic_0001>

<llo_original>
// kernel: tpu_custom_call.1
$region0: #{tpu_custom_call.1}
  #allocation0 [shape = 'u32[]', space=smem, size = 0x4, offset = 0x4, fixed_abs, tag = 'smem constant byte address 0x4 - core index']
  #allocation1 [shape = 'u32[144,128]{1,0:T(1,128)}', space=vmem, size = 0x12000, scoped, tag = 'internal scratch']
  %s0 = inlined_call_operand.vmem [shape: f32[2,1], index: 0, kind: input, shape index: {}]
  %s1 = inlined_call_operand.vmem [shape: f32[2,256], index: 1, kind: input, shape index: {}]
  %s2 = inlined_call_operand.hbm [shape: f32[2,256], index: 2, kind: output, shape index: {}]
  %s3 = sld [smem:[#allocation0]]
  $region18: #{tpu_custom_call.1} parent=0
    _
  %s5 = ssub.s32 1, %s3
  %s6 = scalar_select 0, %s5, %s3
  $region1: #{tpu_custom_call.1} parent=0
    #allocation2 [shape = 'u8[2048]{0}', space=vmem, size = 0x800, scoped, tag = 'output window, operand 0, single buffered']
    #allocation3 [shape = 's32[1]{0}', space=sflag, size = 0x4, scoped, tag = 'scoped memory for tpu_custom_call.1']
    %7 = vsyncpa [#allocation3], 0
    // Predicated region
    $region2: #{tpu_custom_call.1} parent=1 // pred_check
      _
    $region3: #{tpu_custom_call.1} parent=1 // pred_check_branch
      %9 = sbr.rel (0) target = $region5
    $region4: #{tpu_custom_call.1} parent=1 // pred_region
      _
    $region5: #{tpu_custom_call.1} parent=1 // pred_fallthru
      _
    // Predicated region
    $region6: #{tpu_custom_call.1} parent=1 // pred_check
      _
    $region7: #{tpu_custom_call.1} parent=1 // pred_check_branch
      %11 = sbr.rel (0) target = $region9
    $region8: #{tpu_custom_call.1} parent=1 // pred_region
      _
    $region9: #{tpu_custom_call.1} parent=1 // pred_fallthru
      _
    %v12 = vld [vmem:[%s1] sm:$0xf]
    %v13 = vld [vmem:[%s0] sm:$0x3]
    %15 = vset.pattern.permute.xlu0 0
    %16 = vperm.xlu0 %15, %v13
    %v17 = vpop.permute.xlu0 %16
    %v19 = vunpack.c.l.s4 269488144
    %v20 = vunpack.c.0.s8 %v19
    %v21 = vlaneseq
    %v22 = vshrl.u32 %v21, 7
    %v23 = vsub.s32 %v20, %v22
    %v24 = vrot.slane %v17, %v23
    %v26 = vmul.f32 %v12, %v24
    %27 = vst [vmem:[#allocation2] sm:$0xf] %v26
    // Predicated region
    $region10: #{tpu_custom_call.1} parent=1 // pred_check
      _
    $region11: #{tpu_custom_call.1} parent=1 // pred_check_branch
      %29 = sbr.rel (0) target = $region13
    $region12: #{tpu_custom_call.1} parent=1 // pred_region
      %s31 = ssub.s32 64, 64
      %32 = vsyncadd [#allocation3], %s31
      %s34 = sshll.u32 [#allocation2], 4
      %s35 = int_to_ptr.vmem [resolvable:$true] %s34
      %37 = dma.vmem_to_hbm [thread:$0]  %s35, 64, %s2, [#allocation3]
    $region13: #{tpu_custom_call.1} parent=1 // pred_fallthru
      _
    // Predicated region
    $region14: #{tpu_custom_call.1} parent=1 // pred_check
      _
    $region15: #{tpu_custom_call.1} parent=1 // pred_check_branch
      %39 = sbr.rel (0) target = $region17
    $region16: #{tpu_custom_call.1} parent=1 // pred_region
      %40 = dma.done [#allocation3], 64
    $region17: #{tpu_custom_call.1} parent=1 // pred_fallthru
      _
    %41 = vsyncpa [#allocation3], 1

</llo_original>
